<compile_context>
chip_gen: v7x
topology: tpu7x:2x2x1
jax: 0.10.0
libtpu: 0.0.40
codegen_flags: <defaults>
</compile_context>

<pallas_src>
import functools

import jax
import jax.numpy as jnp
from jax import lax
from jax.experimental import pallas as pl
from jax.experimental.pallas import tpu as pltpu


def _round_up(x: int, m: int) -> int:
    return ((x + m - 1) // m) * m


def _cdiv(a: int, b: int) -> int:
    return (a + b - 1) // b


def _best_k_tile(kp: int, cap: int) -> int:
    """Largest multiple of 128 that divides kp (a multiple of 128) and is <= cap."""
    q = kp // 128
    cap_q = max(1, cap // 128)
    best = 1
    d = 1
    while d * d <= q:
        if q % d == 0:
            for c in (d, q // d):
                if c <= cap_q and c > best:
                    best = c
        d += 1
    return best * 128


def _choose_tiles(M: int, N: int, K: int, in_itemsize: int, out_itemsize: int,
                  needs_acc: bool):
    """Pick (tm, tn, tk, Kp) under a VMEM budget; tk always divides Kp."""
    Mp8 = _round_up(M, 8)
    Np128 = _round_up(N, 128)
    Kp = _round_up(K, 128)

    if Mp8 <= 64:
        # Decode-style: weight-bandwidth bound. Keep tm tight, go wide on N/K.
        tm = Mp8
        tn_cap, tk_cap = 2048, 1024
    else:
        tm_cap, tn_cap, tk_cap = 512, 1024, 512
        # Balance tm so M is not grossly over-padded.
        steps_m = _cdiv(Mp8, tm_cap)
        tm = _round_up(_cdiv(Mp8, steps_m), 8)

    steps_n = _cdiv(Np128, tn_cap)
    tn = _round_up(_cdiv(Np128, steps_n), 128)
    tk = _best_k_tile(Kp, tk_cap)

    def footprint(tm_, tn_, tk_):
        f = 2 * (tm_ * tk_ + tn_ * tk_) * in_itemsize   # double-buffered x, W tiles
        f += 2 * tm_ * tn_ * out_itemsize               # double-buffered out tile
        f += 2 * tn_ * 4                                 # bias tile
        if needs_acc:
            f += tm_ * tn_ * 4                           # resident f32 accumulator
        return f

    budget = 20 * 1024 * 1024
    while footprint(tm, tn, tk) > budget and tk > 128:
        tk = _best_k_tile(Kp, tk // 2)
    while footprint(tm, tn, tk) > budget and tn > 128:
        tn = max(128, _round_up(tn // 2, 128))
    while footprint(tm, tn, tk) > budget and tm > 8:
        tm = max(8, _round_up(tm // 2, 8))

    return tm, tn, tk, Kp


def _partial_product(x_ref, w_ref):
    # x_ref: (tm, tk), w_ref: (tn, tk)  ->  (tm, tn), contracting the K axes
    # (trans_b contraction; no wrapper transpose, no in-kernel XLU transpose).
    return lax.dot_general(
        x_ref[...],
        w_ref[...],
        dimension_numbers=(((1,), (1,)), ((), ())),
        preferred_element_type=jnp.float32,
    )


def linear_kernel_f32(x_ref, w_ref, b_ref, o_ref):
    """f32 output: accumulate directly into the resident output tile."""
    k = pl.program_id(2)
    prod = _partial_product(x_ref, w_ref)

    @pl.when(k == 0)
    def _():
        o_ref[...] = prod

    @pl.when(k > 0)
    def _():
        o_ref[...] += prod

    @pl.when(k == pl.num_programs(2) - 1)
    def _():
        o_ref[...] += b_ref[...].astype(jnp.float32)


def linear_kernel_acc(x_ref, w_ref, b_ref, o_ref, acc_ref):
    """Low-precision output: f32 VMEM accumulator, cast once at the end."""
    k = pl.program_id(2)
    prod = _partial_product(x_ref, w_ref)

    @pl.when(k == 0)
    def _():
        acc_ref[...] = prod

    @pl.when(k > 0)
    def _():
        acc_ref[...] += prod

    @pl.when(k == pl.num_programs(2) - 1)
    def _():
        o_ref[...] = (acc_ref[...] + b_ref[...].astype(jnp.float32)).astype(
            o_ref.dtype
        )


@jax.jit
def linear(x, weight, bias):
    """y = x @ weight.T + bias.

    x:      [..., K]  (any float dtype; accumulation is always f32)
    weight: [N, K]    (PyTorch convention, NOT transposed by the wrapper)
    bias:   [N]
    returns [..., N] in x.dtype
    """
    orig_shape = x.shape
    K = orig_shape[-1]
    x2 = x.reshape(-1, K)
    M = x2.shape[0]
    N, K2 = weight.shape
    assert K == K2 and bias.shape == (N,)

    out_dtype = x.dtype
    out_itemsize = jnp.dtype(out_dtype).itemsize
    needs_acc = jnp.dtype(out_dtype) != jnp.dtype(jnp.float32)

    tm, tn, tk, Kp = _choose_tiles(
        M, N, K, x.dtype.itemsize, out_itemsize, needs_acc
    )
    Mp = _round_up(M, tm)
    Np = _round_up(N, tn)

    # Pad to tile multiples (zero-padding is exact for the matmul; padded
    # rows/cols are sliced off below). K never over-pads: tk divides Kp.
    if (Mp, Kp) != (M, K):
        x2 = jnp.pad(x2, ((0, Mp - M), (0, Kp - K)))
    w = weight
    if (Np, Kp) != (N, K):
        w = jnp.pad(w, ((0, Np - N), (0, Kp - K)))
    b2 = bias.reshape(1, N)
    if Np != N:
        b2 = jnp.pad(b2, ((0, 0), (0, Np - N)))

    grid = (Mp // tm, Np // tn, Kp // tk)
    grid_m, grid_n, _ = grid

    # Real streamed HBM traffic: x is re-read once per N tile, W once per M tile.
    flops = 2 * Mp * Np * Kp
    bytes_accessed = (
        x2.size * x2.dtype.itemsize * grid_n
        + w.size * w.dtype.itemsize * grid_m
        + b2.size * b2.dtype.itemsize * grid_m
        + Mp * Np * out_itemsize
    )

    kernel = linear_kernel_acc if needs_acc else linear_kernel_f32
    scratch_shapes = [pltpu.VMEM((tm, tn), jnp.float32)] if needs_acc else []

    out_p = pl.pallas_call(
        kernel,
        out_shape=jax.ShapeDtypeStruct((Mp, Np), out_dtype),
        grid_spec=pltpu.PrefetchScalarGridSpec(
            num_scalar_prefetch=0,
            grid=grid,
            in_specs=[
                pl.BlockSpec((tm, tk), lambda i, j, k: (i, k)),   # x tile
                pl.BlockSpec((tn, tk), lambda i, j, k: (j, k)),   # W tile ([N,K] layout)
                pl.BlockSpec((1, tn), lambda i, j, k: (0, j)),    # bias tile
            ],
            out_specs=pl.BlockSpec((tm, tn), lambda i, j, k: (i, j)),
            scratch_shapes=scratch_shapes,
        ),
        compiler_params=pltpu.CompilerParams(
            dimension_semantics=("parallel", "parallel", "arbitrary"),
            vmem_limit_bytes=32 * 1024 * 1024,
        ),
        cost_estimate=pl.CostEstimate(
            flops=flops, transcendentals=0, bytes_accessed=bytes_accessed
        ),
    )(x2, w, b2)

    out = out_p[:M, :N]
    return out.reshape(orig_shape[:-1] + (N,))


if __name__ == "__main__":
    key = jax.random.PRNGKey(0)
    kx, kw = jax.random.split(key)

    # Small shapes consistent with the module's forward ([bsz, in_features]).
    bsz, in_features, out_features = 8, 32, 16
    x = jax.random.normal(kx, (bsz, in_features), dtype=jnp.float32)
    # Matches nn.Parameter(torch.randn(out_features, in_features))
    weight = jax.random.normal(kw, (out_features, in_features), dtype=jnp.float32)
    # Matches nn.Parameter(torch.zeros(out_features))
    bias = jnp.zeros((out_features,), dtype=jnp.float32)

    out = jax.block_until_ready(linear(x, weight, bias))
    ref = x @ weight.T + bias
    assert out.shape == (bsz, out_features)
    assert jnp.allclose(out, ref, atol=1e-5, rtol=1e-5)

    # Multi-tile check (grid > 1 on M, N and K) to exercise the tiled reduction
    # with direct-first-write accumulation and bias-once finalize.
    kx2, kw2, kb2 = jax.random.split(jax.random.PRNGKey(1), 3)
    M2, K2, N2 = 640, 1536, 1024
    x2 = jax.random.normal(kx2, (M2, K2), dtype=jnp.float32)
    w2 = jax.random.normal(kw2, (N2, K2), dtype=jnp.float32)
    b2 = jax.random.normal(kb2, (N2,), dtype=jnp.float32)
    out2 = jax.block_until_ready(linear(x2, w2, b2))
    ref2 = x2 @ w2.T + b2
    assert jnp.allclose(out2, ref2, atol=1e-2, rtol=1e-3)

    # Low-precision output path (f32 VMEM accumulator + final cast).
    xb = x2[:64, :256].astype(jnp.bfloat16)
    wb = w2[:128, :256].astype(jnp.bfloat16)
    bb = b2[:128]
    outb = jax.block_until_ready(linear(xb, wb, bb))
    refb = (xb.astype(jnp.float32) @ wb.astype(jnp.float32).T
            + bb.astype(jnp.float32))
    assert outb.dtype == jnp.bfloat16
    assert jnp.allclose(outb.astype(jnp.float32), refb, atol=0.25, rtol=2e-2)

    print("KERNEL_OK")
</pallas_src>

<mosaic_0001>
module attributes {stable_mosaic.version = 11 : i64} {
  func.func @linear_kernel_f32(%arg0: i32, %arg1: i32, %arg2: i32, %arg3: memref<8x128xf32, #tpu.memory_space<vmem>>, %arg4: memref<128x128xf32, #tpu.memory_space<vmem>>, %arg5: memref<1x128xf32, #tpu.memory_space<vmem>>, %arg6: memref<8x128xf32, #tpu.memory_space<vmem>>) attributes {dimension_semantics = [#tpu.dimension_semantics<parallel>, #tpu.dimension_semantics<parallel>, #tpu.dimension_semantics<arbitrary>], iteration_bounds = array<i64: 1, 1, 1>, scalar_prefetch = 0 : i64, scratch_operands = 0 : i64, tpu.core_type = #tpu.core_type<tc>, window_params = [{transform_indices = @transform_0, window_bounds = array<i64: 8, 128>}, {transform_indices = @transform_1, window_bounds = array<i64: 128, 128>}, {transform_indices = @transform_2, window_bounds = array<i64: 1, 128>}, {transform_indices = @transform_3, window_bounds = array<i64: 8, 128>}]} {
    %c0 = arith.constant 0 : index
    %c0_0 = arith.constant 0 : index
    %0 = vector.load %arg3[%c0, %c0_0] : memref<8x128xf32, #tpu.memory_space<vmem>>, vector<8x128xf32>
    %c0_1 = arith.constant 0 : index
    %c0_2 = arith.constant 0 : index
    %1 = vector.load %arg4[%c0_1, %c0_2] : memref<128x128xf32, #tpu.memory_space<vmem>>, vector<128x128xf32>
    %cst = arith.constant dense<0.000000e+00> : vector<8x128xf32>
    %2 = tpu.matmul %0, %1, %cst {dimension_numbers = #tpu.dot_dimension_numbers<[1], [1], [0], [0], [0, 0, 1, 0], [], []>} : vector<8x128xf32>, vector<128x128xf32>, vector<8x128xf32> -> vector<8x128xf32>
    %c0_i32 = arith.constant 0 : i32
    %3 = arith.cmpi eq, %arg2, %c0_i32 : i32
    %4 = arith.extui %3 : i1 to i32
    %c0_i32_3 = arith.constant 0 : i32
    %5 = arith.cmpi ne, %4, %c0_i32_3 : i32
    scf.if %5 {
      %c0_8 = arith.constant 0 : index
      %c0_9 = arith.constant 0 : index
      %12 = vector.load %arg6[%c0_8, %c0_9] : memref<8x128xf32, #tpu.memory_space<vmem>>, vector<8x128xf32>
      tpu.vector_store %arg6[%c0_8, %c0_9], %2 {strides = array<i32>} : memref<8x128xf32, #tpu.memory_space<vmem>>, vector<8x128xf32>,
    } else {
    }
    %c0_i32_4 = arith.constant 0 : i32
    %6 = arith.cmpi sgt, %arg2, %c0_i32_4 : i32
    %7 = arith.extui %6 : i1 to i32
    %c0_i32_5 = arith.constant 0 : i32
    %8 = arith.cmpi ne, %7, %c0_i32_5 : i32
    scf.if %8 {
      %c0_8 = arith.constant 0 : index
      %c0_9 = arith.constant 0 : index
      %12 = vector.load %arg6[%c0_8, %c0_9] : memref<8x128xf32, #tpu.memory_space<vmem>>, vector<8x128xf32>
      %13 = arith.addf %12, %2 : vector<8x128xf32>
      %c0_10 = arith.constant 0 : index
      %c0_11 = arith.constant 0 : index
      %14 = vector.load %arg6[%c0_10, %c0_11] : memref<8x128xf32, #tpu.memory_space<vmem>>, vector<8x128xf32>
      tpu.vector_store %arg6[%c0_10, %c0_11], %13 {strides = array<i32>} : memref<8x128xf32, #tpu.memory_space<vmem>>, vector<8x128xf32>,
    } else {
    }
    %c0_i32_6 = arith.constant 0 : i32
    %9 = arith.cmpi eq, %arg2, %c0_i32_6 : i32
    %10 = arith.extui %9 : i1 to i32
    %c0_i32_7 = arith.constant 0 : i32
    %11 = arith.cmpi ne, %10, %c0_i32_7 : i32
    scf.if %11 {
      %c0_8 = arith.constant 0 : index
      %c0_9 = arith.constant 0 : index
      %12 = vector.load %arg6[%c0_8, %c0_9] : memref<8x128xf32, #tpu.memory_space<vmem>>, vector<8x128xf32>
      %c0_10 = arith.constant 0 : index
      %c0_11 = arith.constant 0 : index
      %13 = vector.load %arg5[%c0_10, %c0_11] : memref<1x128xf32, #tpu.memory_space<vmem>>, vector<1x128xf32>
      %14 = vector.broadcast %13 : vector<1x128xf32> to vector<8x128xf32>
      %15 = arith.addf %12, %14 : vector<8x128xf32>
      %c0_12 = arith.constant 0 : index
      %c0_13 = arith.constant 0 : index
      %16 = vector.load %arg6[%c0_12, %c0_13] : memref<8x128xf32, #tpu.memory_space<vmem>>, vector<8x128xf32>
      tpu.vector_store %arg6[%c0_12, %c0_13], %15 {strides = array<i32>} : memref<8x128xf32, #tpu.memory_space<vmem>>, vector<8x128xf32>,
    } else {
    }
    return
  }
  func.func @transform_0(%arg0: i32, %arg1: i32, %arg2: i32) -> (i32, i32) {
    %c0_i32 = arith.constant 0 : i32
    return %arg0, %arg2 : i32, i32
  }
  func.func @transform_1(%arg0: i32, %arg1: i32, %arg2: i32) -> (i32, i32) {
    %c0_i32 = arith.constant 0 : i32
    return %arg1, %arg2 : i32, i32
  }
  func.func @transform_2(%arg0: i32, %arg1: i32, %arg2: i32) -> (i32, i32) {
    %c0_i32 = arith.constant 0 : i32
    %c0_i32_0 = arith.constant 0 : i32
    return %c0_i32, %arg1 : i32, i32
  }
  func.func @transform_3(%arg0: i32, %arg1: i32, %arg2: i32) -> (i32, i32) {
    %c0_i32 = arith.constant 0 : i32
    return %arg0, %arg1 : i32, i32
  }
}

</mosaic_0001>

<llo_original>
// kernel: linear.1
$region0: #{linear.1}
  #allocation0 [shape = 'u32[]', space=smem, size = 0x4, offset = 0x4, fixed_abs, tag = 'smem constant byte address 0x4 - core index']
  #allocation1 [shape = 'u32[144,128]{1,0:T(1,128)}', space=vmem, size = 0x12000, scoped, tag = 'internal scratch']
  %s0 = inlined_call_operand.vmem [shape: f32[8,128], index: 0, kind: input, shape index: {}]
  %s1 = inlined_call_operand.vmem [shape: f32[128,128], index: 1, kind: input, shape index: {}]
  %s2 = inlined_call_operand.vmem [shape: f32[1,128], index: 2, kind: input, shape index: {}]
  %s3 = inlined_call_operand.hbm [shape: f32[8,128], index: 3, kind: output, shape index: {}]
  %s4 = sld [smem:[#allocation0]]
  $region34: #{linear.1} parent=0
    _
  %s6 = ssub.s32 1, %s4
  %s7 = scalar_select 0, %s6, %s4
  $region1: #{linear.1} parent=0
    #allocation2 [shape = 'u8[4096]{0}', space=vmem, size = 0x1000, scoped, tag = 'output window, operand 0, single buffered']
    #allocation3 [shape = 's32[1]{0}', space=sflag, size = 0x4, scoped, tag = 'scoped memory for linear.1']
    %8 = vsyncpa [#allocation3], 0
    // Predicated region
    $region2: #{linear.1} parent=1 // pred_check
      _
    $region3: #{linear.1} parent=1 // pred_check_branch
      %10 = sbr.rel (0) target = $region5
    $region4: #{linear.1} parent=1 // pred_region
      _
    $region5: #{linear.1} parent=1 // pred_fallthru
      _
    // Predicated region
    $region6: #{linear.1} parent=1 // pred_check
      _
    $region7: #{linear.1} parent=1 // pred_check_branch
      %12 = sbr.rel (0) target = $region9
    $region8: #{linear.1} parent=1 // pred_region
      _
    $region9: #{linear.1} parent=1 // pred_fallthru
      _
    // Predicated region
    $region10: #{linear.1} parent=1 // pred_check
      _
    $region11: #{linear.1} parent=1 // pred_check_branch
      %14 = sbr.rel (0) target = $region13
    $region12: #{linear.1} parent=1 // pred_region
      _
    $region13: #{linear.1} parent=1 // pred_fallthru
      _
    %v15 = vld [vmem:[%s0] sm:$0xff]
    %v16 = vld [vmem:[%s1] sm:$0xff]
    %v17 = vld [vmem:[%s1 + $0x8] sm:$0xff]
    %v18 = vld [vmem:[%s1 + $0x10] sm:$0xff]
    %v19 = vld [vmem:[%s1 + $0x18] sm:$0xff]
    %v20 = vld [vmem:[%s1 + $0x20] sm:$0xff]
    %v21 = vld [vmem:[%s1 + $0x28] sm:$0xff]
    %v22 = vld [vmem:[%s1 + $0x30] sm:$0xff]
    %v23 = vld [vmem:[%s1 + $0x38] sm:$0xff]
    %v24 = vld [vmem:[%s1 + $0x40] sm:$0xff]
    %v25 = vld [vmem:[%s1 + $0x48] sm:$0xff]
    %v26 = vld [vmem:[%s1 + $0x50] sm:$0xff]
    %v27 = vld [vmem:[%s1 + $0x58] sm:$0xff]
    %v28 = vld [vmem:[%s1 + $0x60] sm:$0xff]
    %v29 = vld [vmem:[%s1 + $0x68] sm:$0xff]
    %v30 = vld [vmem:[%s1 + $0x70] sm:$0xff]
    %v31 = vld [vmem:[%s1 + $0x78] sm:$0xff]
    %32 = vmatprep.subr.mxu0 0.0
    %33 = vmatpush1.xpose.msra.mxu0 %v16
    %34 = vmatprep.subr.mxu0 0.0
    %35 = vmatpush1.xpose.msra.mxu0 %v17
    %36 = vmatprep.subr.mxu0 0.0
    %37 = vmatpush1.xpose.msra.mxu0 %v18
    %38 = vmatprep.subr.mxu0 0.0
    %39 = vmatpush1.xpose.msra.mxu0 %v19
    %40 = vmatprep.subr.mxu0 0.0
    %41 = vmatpush1.xpose.msra.mxu0 %v20
    %42 = vmatprep.subr.mxu0 0.0
    %43 = vmatpush1.xpose.msra.mxu0 %v21
    %44 = vmatprep.subr.mxu0 0.0
    %45 = vmatpush1.xpose.msra.mxu0 %v22
    %46 = vmatprep.subr.mxu0 0.0
    %47 = vmatpush1.xpose.msra.mxu0 %v23
    %48 = vmatprep.subr.mxu0 0.0
    %49 = vmatpush1.xpose.msra.mxu0 %v24
    %50 = vmatprep.subr.mxu0 0.0
    %51 = vmatpush1.xpose.msra.mxu0 %v25
    %52 = vmatprep.subr.mxu0 0.0
    %53 = vmatpush1.xpose.msra.mxu0 %v26
    %54 = vmatprep.subr.mxu0 0.0
    %55 = vmatpush1.xpose.msra.mxu0 %v27
    %56 = vmatprep.subr.mxu0 0.0
    %57 = vmatpush1.xpose.msra.mxu0 %v28
    %58 = vmatprep.subr.mxu0 0.0
    %59 = vmatpush1.xpose.msra.mxu0 %v29
    %60 = vmatprep.subr.mxu0 0.0
    %61 = vmatpush1.xpose.msra.mxu0 %v30
    %62 = vmatprep.subr.mxu0 0.0
    %63 = vmatpush1.xpose.msra.mxu0 %v31
    %64 = vmatprep.subr.mxu0 0.0
    %65 = vmatpush1.xpose.msra.mxu0 0.0
    %66 = vmatprep.subr.mxu0 0.0
    %67 = vmatpush1.xpose.msra.mxu0 0.0
    %68 = vmatprep.subr.mxu0 0.0
    %69 = vmatpush1.xpose.msra.mxu0 0.0
    %70 = vmatprep.subr.mxu0 0.0
    %71 = vmatpush1.xpose.msra.mxu0 0.0
    %72 = vmatprep.subr.mxu0 0.0
    %73 = vmatpush1.xpose.msra.mxu0 0.0
    %74 = vmatprep.subr.mxu0 0.0
    %75 = vmatpush1.xpose.msra.mxu0 0.0
    %76 = vmatprep.subr.mxu0 0.0
    %77 = vmatpush1.xpose.msra.mxu0 0.0
    %78 = vmatprep.subr.mxu0 0.0
    %79 = vmatpush1.xpose.msra.mxu0 0.0
    %80 = vmatprep.subr.mxu0 0.0
    %81 = vmatpush1.xpose.msra.mxu0 0.0
    %82 = vmatprep.subr.mxu0 0.0
    %83 = vmatpush1.xpose.msra.mxu0 0.0
    %84 = vmatprep.subr.mxu0 0.0
    %85 = vmatpush1.xpose.msra.mxu0 0.0
    %86 = vmatprep.subr.mxu0 0.0
    %87 = vmatpush1.xpose.msra.mxu0 0.0
    %88 = vmatprep.subr.mxu0 0.0
    %89 = vmatpush1.xpose.msra.mxu0 0.0
    %90 = vmatprep.subr.mxu0 0.0
    %91 = vmatpush1.xpose.msra.mxu0 0.0
    %92 = vmatprep.subr.mxu0 0.0
    %93 = vmatpush1.xpose.msra.mxu0 0.0
    %94 = vmatprep.subr.mxu0 0.0
    %95 = vmatpush1.xpose.msra.mxu0 0.0
    %96 = vmatprep.mubr.f32.mxu0 0.0
    %97 = vmatmul.mubr.f32.gmra.mrb[0].mxu0 %v15
    %v98 = vpop.f32.mrb[0].mxu0
    %v99 = vadd.f32 0.0, %v98
    %v100 = vpop.f32.mrb[0].mxu0
    %101 = vdwg.mxu0
    %p102 = scmp.eq.s32.totalorder 0, 0
    // Predicated region
    $region14: #{linear.1} parent=1 // pred_check
      %p103 = pneg %p102
    $region15: #{linear.1} parent=1 // pred_check_branch
      %105 = sbr.rel (%p103) target = $region17
    $region16: #{linear.1} parent=1 // pred_region
      %106 = vst [vmem:[#allocation2] sm:$0xff] %v99
    $region17: #{linear.1} parent=1 // pred_fallthru
      _
    %p107 = scmp.gt.s32.totalorder 0, 0
    // Predicated region
    $region18: #{linear.1} parent=1 // pred_check
      %p108 = pneg %p107
    $region19: #{linear.1} parent=1 // pred_check_branch
      %110 = sbr.rel (%p108) target = $region21
    $region20: #{linear.1} parent=1 // pred_region
      %v111 = vld [vmem:[#allocation2] sm:$0xff]
      %v112 = vadd.f32 %v111, %v99
      %113 = vst [vmem:[#allocation2] sm:$0xff] %v112
    $region21: #{linear.1} parent=1 // pred_fallthru
      _
    // Predicated region
    $region22: #{linear.1} parent=1 // pred_check
      %p114 = pneg %p102
    $region23: #{linear.1} parent=1 // pred_check_branch
      %116 = sbr.rel (%p114) target = $region25
    $region24: #{linear.1} parent=1 // pred_region
      %v117 = vld [vmem:[#allocation2] sm:$0xff]
      %v118 = vld [vmem:[%s2] sm:$0x1]
      %v120 = vlaneseq
      %v121 = vshrl.u32 %v120, 7
      %v122 = vsub.s32 0, %v121
      %v123 = vrot.slane %v118, %v122
      %v125 = vadd.f32 %v117, %v123
      %126 = vst [vmem:[#allocation2] sm:$0xff] %v125
    $region25: #{linear.1} parent=1 // pred_fallthru
      _
    // Predicated region
    $region26: #{linear.1} parent=1 // pred_check
      _
    $region27: #{linear.1} parent=1 // pred_check_branch
      %128 = sbr.rel (0) target = $region29
    $region28: #{linear.1} parent=1 // pred_region
      %s130 = ssub.s32 128, 128
      %131 = vsyncadd [#allocation3], %s130
      %s133 = sshll.u32 [#allocation2], 4
      %s134 = int_to_ptr.vmem [resolvable:$true] %s133
      %136 = dma.vmem_to_hbm [thread:$0]  %s134, 128, %s3, [#allocation3]
    $region29: #{linear.1} parent=1 // pred_fallthru
      _
    // Predicated region
    $region30: #{linear.1} parent=1 // pred_check
      _
    $region31: #{linear.1} parent=1 // pred_check_branch
      %138 = sbr.rel (0) target = $region33
    $region32: #{linear.1} parent=1 // pred_region
      %139 = dma.done [#allocation3], 128
    $region33: #{linear.1} parent=1 // pred_fallthru
      _
    %140 = vsyncpa [#allocation3], 1

</llo_original>
